<compile_context>
chip_gen: v6e
topology: v6e:2x2x1
jax: 0.10.0
libtpu: 0.0.40
codegen_flags: <defaults>
</compile_context>

<pallas_src>
import jax
import jax.numpy as jnp
from jax.experimental import pallas as pl
from jax.experimental.pallas import tpu as pltpu

D_IN = 28 * 28   # 784
H1 = 128
H2 = 64
H2_PAD = 128     # fc2 output padded 64 -> 128 (lane-dense h2, full MXU K for fc3)
N_OUT = 10
N_PAD = 128      # fc3 output padded 10 -> 128 (lane-dense output stores)


def mlp_kernel(x_ref, w1_ref, b1_ref, w2_ref, b2_ref, w3_ref, b3_ref, o_ref):
    # Cast the streamed x tile to the matmul dtype in VMEM (cheap VPU op; no
    # extra HBM pass in the wrapper).  No-op when dtypes already match.
    x = x_ref[...].astype(w1_ref.dtype)

    # fc1 + ReLU (MXU matmul, f32 accumulate; epilogue stays f32 on the VPU)
    h1 = jnp.dot(x, w1_ref[...], preferred_element_type=jnp.float32)
    h1 = jnp.maximum(h1 + b1_ref[...], 0.0)

    # fc2 + ReLU (output dim zero-padded to 128 -> lane-dense h2)
    h2 = jnp.dot(h1.astype(w2_ref.dtype), w2_ref[...],
                 preferred_element_type=jnp.float32)
    h2 = jnp.maximum(h2 + b2_ref[...], 0.0)

    # fc3 (no activation; output dim zero-padded to 128 -> unmasked stores)
    out = jnp.dot(h2.astype(w3_ref.dtype), w3_ref[...],
                  preferred_element_type=jnp.float32)
    o_ref[...] = (out + b3_ref[...]).astype(o_ref.dtype)


def _round_up(v, m):
    return ((v + m - 1) // m) * m


def net_forward(x, params, *, tile_m=1024, use_bf16=True):
    """x: (B, 1, 28, 28) (or anything reshaping to (B, 784)). Returns (B, 10) f32."""
    w1, b1, w2, b2, w3, b3 = params
    x2d = x.reshape(-1, D_IN)          # no dtype cast, no pad: zero extra HBM passes
    B = x2d.shape[0]

    # --- one-time weight prep (tiny: <0.5 MiB total; in real use hoist this
    # --- out of the forward path) -------------------------------------------
    mm_dtype = jnp.bfloat16 if use_bf16 else jnp.float32
    w1c = w1.astype(mm_dtype)
    b1c = b1.reshape(1, H1).astype(jnp.float32)
    # Zero-pad fc2 to 128 outputs and fc3 to 128 outputs; padded bias entries
    # are exactly 0 so the [:, :10] slice is unchanged.
    w2c = jnp.zeros((H1, H2_PAD), mm_dtype).at[:, :H2].set(w2.astype(mm_dtype))
    b2c = jnp.zeros((1, H2_PAD), jnp.float32).at[:, :H2].set(
        b2.reshape(1, H2).astype(jnp.float32))
    w3c = jnp.zeros((H2_PAD, N_PAD), mm_dtype).at[:H2, :N_OUT].set(
        w3.astype(mm_dtype))
    b3c = jnp.zeros((1, N_PAD), jnp.float32).at[:, :N_OUT].set(
        b3.reshape(1, N_OUT).astype(jnp.float32))

    # --- batch tile ----------------------------------------------------------
    if B < 16:
        tm = B  # single full block (block == array dims, so no (8,128) rule)
    else:
        # Multiple of 16 (bf16 sublane packing) and sized so the grid has at
        # least 2 steps (v7x: both TensorCores get work via the parallel axis).
        tm = min(tile_m, _round_up(pl.cdiv(B, 2), 16))
    grid = (pl.cdiv(B, tm),)

    def resident(arr):
        # Full-shape block, same block every grid step -> stays in VMEM.
        return pl.BlockSpec(arr.shape, lambda i: (0, 0))

    flops = 2 * B * (D_IN * H1 + H1 * H2_PAD + H2_PAD * N_PAD)
    bytes_accessed = (
        B * D_IN * x2d.dtype.itemsize
        + sum(int(a.size) * a.dtype.itemsize
              for a in (w1c, b1c, w2c, b2c, w3c, b3c))
        + B * N_PAD * 4
    )

    # TODO(synk): if a profile shows exposed DMA at large tm, add
    # pipeline_mode=pl.Buffered(3) to the x BlockSpec.
    out = pl.pallas_call(
        mlp_kernel,
        out_shape=jax.ShapeDtypeStruct((B, N_PAD), jnp.float32),
        grid=grid,
        in_specs=[
            pl.BlockSpec((tm, D_IN), lambda i: (i, 0)),   # streamed x tiles
            resident(w1c), resident(b1c),
            resident(w2c), resident(b2c),
            resident(w3c), resident(b3c),
        ],
        out_specs=pl.BlockSpec((tm, N_PAD), lambda i: (i, 0)),
        compiler_params=pltpu.CompilerParams(
            dimension_semantics=("parallel",),
            vmem_limit_bytes=48 * 1024 * 1024),
        cost_estimate=pl.CostEstimate(
            flops=flops, transcendentals=0, bytes_accessed=bytes_accessed),
    )(x2d, w1c, b1c, w2c, b2c, w3c, b3c)

    return out[:, :N_OUT]


def init_params(key):
    """Deterministic init; shapes mirror nn.Linear(in, out) but stored as (in, out)."""
    k1, k2, k3 = jax.random.split(key, 3)

    def linear(k, fan_in, fan_out):
        bound = 1.0 / jnp.sqrt(jnp.float32(fan_in))
        kw, kb = jax.random.split(k)
        w = jax.random.uniform(kw, (fan_in, fan_out), jnp.float32, -bound, bound)
        b = jax.random.uniform(kb, (1, fan_out), jnp.float32, -bound, bound)
        return w, b

    w1, b1 = linear(k1, D_IN, H1)
    w2, b2 = linear(k2, H1, H2)
    w3, b3 = linear(k3, H2, N_OUT)
    return (w1, b1, w2, b2, w3, b3)


def _reference(x, params):
    w1, b1, w2, b2, w3, b3 = params
    hi = jax.lax.Precision.HIGHEST
    x2d = x.reshape(-1, D_IN).astype(jnp.float32)
    h = jnp.maximum(jnp.dot(x2d, w1, precision=hi) + b1, 0.0)
    h = jnp.maximum(jnp.dot(h, w2, precision=hi) + b2, 0.0)
    return jnp.dot(h, w3, precision=hi) + b3


if __name__ == "__main__":
    key = jax.random.PRNGKey(0)
    pkey, xkey1, xkey2 = jax.random.split(key, 3)
    params = init_params(pkey)

    # 1) Small MNIST-like batch, full-precision path (single full block).
    x_small = jax.random.normal(xkey1, (8, 1, 28, 28), dtype=jnp.float32)
    out_small = net_forward(x_small, params, use_bf16=False)
    jax.block_until_ready(out_small)
    ref_small = _reference(x_small, params)
    assert out_small.shape == (8, 10)
    assert jnp.allclose(out_small, ref_small, atol=2e-3, rtol=2e-3)

    # 2) Larger, non-tile-aligned batch, bf16 MXU path: exercises the 2-step
    #    batch grid (tm=112), ragged last tile, and resident-weight pipeline.
    x_big = jax.random.normal(xkey2, (200, 1, 28, 28), dtype=jnp.float32)
    out_big = net_forward(x_big, params, tile_m=1024, use_bf16=True)
    jax.block_until_ready(out_big)
    ref_big = _reference(x_big, params)
    assert out_big.shape == (200, 10)
    assert jnp.allclose(out_big, ref_big, atol=5e-2, rtol=5e-2)

    print("KERNEL_OK")
</pallas_src>

<mosaic_0001>
module attributes {stable_mosaic.version = 11 : i64} {
  func.func @mlp_kernel(%arg0: i32, %arg1: memref<8x784xf32, #tpu.memory_space<vmem>>, %arg2: memref<784x128xf32, #tpu.memory_space<vmem>>, %arg3: memref<1x128xf32, #tpu.memory_space<vmem>>, %arg4: memref<128x128xf32, #tpu.memory_space<vmem>>, %arg5: memref<1x128xf32, #tpu.memory_space<vmem>>, %arg6: memref<128x128xf32, #tpu.memory_space<vmem>>, %arg7: memref<1x128xf32, #tpu.memory_space<vmem>>, %arg8: memref<8x128xf32, #tpu.memory_space<vmem>>) attributes {dimension_semantics = [#tpu.dimension_semantics<parallel>], iteration_bounds = array<i64: 1>, scalar_prefetch = 0 : i64, scratch_operands = 0 : i64, tpu.core_type = #tpu.core_type<tc>, window_params = [{transform_indices = @transform_0, window_bounds = array<i64: 8, 784>}, {pipeline_mode = #tpu.pipeline_mode<synchronous>, transform_indices = @transform_1, window_bounds = array<i64: 784, 128>}, {pipeline_mode = #tpu.pipeline_mode<synchronous>, transform_indices = @transform_2, window_bounds = array<i64: 1, 128>}, {pipeline_mode = #tpu.pipeline_mode<synchronous>, transform_indices = @transform_3, window_bounds = array<i64: 128, 128>}, {pipeline_mode = #tpu.pipeline_mode<synchronous>, transform_indices = @transform_4, window_bounds = array<i64: 1, 128>}, {pipeline_mode = #tpu.pipeline_mode<synchronous>, transform_indices = @transform_5, window_bounds = array<i64: 128, 128>}, {pipeline_mode = #tpu.pipeline_mode<synchronous>, transform_indices = @transform_6, window_bounds = array<i64: 1, 128>}, {transform_indices = @transform_7, window_bounds = array<i64: 8, 128>}]} {
    %c0 = arith.constant 0 : index
    %c0_0 = arith.constant 0 : index
    %0 = vector.load %arg1[%c0, %c0_0] : memref<8x784xf32, #tpu.memory_space<vmem>>, vector<8x784xf32>
    %c0_1 = arith.constant 0 : index
    %c0_2 = arith.constant 0 : index
    %1 = vector.load %arg2[%c0_1, %c0_2] : memref<784x128xf32, #tpu.memory_space<vmem>>, vector<784x128xf32>
    %cst = arith.constant dense<0.000000e+00> : vector<8x128xf32>
    %2 = tpu.matmul %0, %1, %cst {dimension_numbers = #tpu.dot_dimension_numbers<[1], [0], [0], [1], [0, 0, 1, 1], [], []>} : vector<8x784xf32>, vector<784x128xf32>, vector<8x128xf32> -> vector<8x128xf32>
    %c0_3 = arith.constant 0 : index
    %c0_4 = arith.constant 0 : index
    %3 = vector.load %arg3[%c0_3, %c0_4] : memref<1x128xf32, #tpu.memory_space<vmem>>, vector<1x128xf32>
    %4 = vector.broadcast %3 : vector<1x128xf32> to vector<8x128xf32>
    %5 = arith.addf %2, %4 : vector<8x128xf32>
    %cst_5 = arith.constant 0.000000e+00 : f32
    %6 = vector.broadcast %cst_5 : f32 to vector<8x128xf32>
    %7 = arith.maximumf %5, %6 : vector<8x128xf32>
    %c0_6 = arith.constant 0 : index
    %c0_7 = arith.constant 0 : index
    %8 = vector.load %arg4[%c0_6, %c0_7] : memref<128x128xf32, #tpu.memory_space<vmem>>, vector<128x128xf32>
    %cst_8 = arith.constant dense<0.000000e+00> : vector<8x128xf32>
    %9 = tpu.matmul %7, %8, %cst_8 {dimension_numbers = #tpu.dot_dimension_numbers<[1], [0], [0], [1], [0, 0, 1, 1], [], []>} : vector<8x128xf32>, vector<128x128xf32>, vector<8x128xf32> -> vector<8x128xf32>
    %c0_9 = arith.constant 0 : index
    %c0_10 = arith.constant 0 : index
    %10 = vector.load %arg5[%c0_9, %c0_10] : memref<1x128xf32, #tpu.memory_space<vmem>>, vector<1x128xf32>
    %11 = vector.broadcast %10 : vector<1x128xf32> to vector<8x128xf32>
    %12 = arith.addf %9, %11 : vector<8x128xf32>
    %cst_11 = arith.constant 0.000000e+00 : f32
    %13 = vector.broadcast %cst_11 : f32 to vector<8x128xf32>
    %14 = arith.maximumf %12, %13 : vector<8x128xf32>
    %c0_12 = arith.constant 0 : index
    %c0_13 = arith.constant 0 : index
    %15 = vector.load %arg6[%c0_12, %c0_13] : memref<128x128xf32, #tpu.memory_space<vmem>>, vector<128x128xf32>
    %cst_14 = arith.constant dense<0.000000e+00> : vector<8x128xf32>
    %16 = tpu.matmul %14, %15, %cst_14 {dimension_numbers = #tpu.dot_dimension_numbers<[1], [0], [0], [1], [0, 0, 1, 1], [], []>} : vector<8x128xf32>, vector<128x128xf32>, vector<8x128xf32> -> vector<8x128xf32>
    %c0_15 = arith.constant 0 : index
    %c0_16 = arith.constant 0 : index
    %17 = vector.load %arg7[%c0_15, %c0_16] : memref<1x128xf32, #tpu.memory_space<vmem>>, vector<1x128xf32>
    %18 = vector.broadcast %17 : vector<1x128xf32> to vector<8x128xf32>
    %19 = arith.addf %16, %18 : vector<8x128xf32>
    %c0_17 = arith.constant 0 : index
    %c0_18 = arith.constant 0 : index
    %20 = vector.load %arg8[%c0_17, %c0_18] : memref<8x128xf32, #tpu.memory_space<vmem>>, vector<8x128xf32>
    tpu.vector_store %arg8[%c0_17, %c0_18], %19 {strides = array<i32>} : memref<8x128xf32, #tpu.memory_space<vmem>>, vector<8x128xf32>,
    return
  }
  func.func @transform_0(%arg0: i32) -> (i32, i32) {
    %c0_i32 = arith.constant 0 : i32
    %c0_i32_0 = arith.constant 0 : i32
    return %arg0, %c0_i32 : i32, i32
  }
  func.func @transform_1(%arg0: i32) -> (i32, i32) {
    %c0_i32 = arith.constant 0 : i32
    %c0_i32_0 = arith.constant 0 : i32
    %c0_i32_1 = arith.constant 0 : i32
    return %c0_i32, %c0_i32_0 : i32, i32
  }
  func.func @transform_2(%arg0: i32) -> (i32, i32) {
    %c0_i32 = arith.constant 0 : i32
    %c0_i32_0 = arith.constant 0 : i32
    %c0_i32_1 = arith.constant 0 : i32
    return %c0_i32, %c0_i32_0 : i32, i32
  }
  func.func @transform_3(%arg0: i32) -> (i32, i32) {
    %c0_i32 = arith.constant 0 : i32
    %c0_i32_0 = arith.constant 0 : i32
    %c0_i32_1 = arith.constant 0 : i32
    return %c0_i32, %c0_i32_0 : i32, i32
  }
  func.func @transform_4(%arg0: i32) -> (i32, i32) {
    %c0_i32 = arith.constant 0 : i32
    %c0_i32_0 = arith.constant 0 : i32
    %c0_i32_1 = arith.constant 0 : i32
    return %c0_i32, %c0_i32_0 : i32, i32
  }
  func.func @transform_5(%arg0: i32) -> (i32, i32) {
    %c0_i32 = arith.constant 0 : i32
    %c0_i32_0 = arith.constant 0 : i32
    %c0_i32_1 = arith.constant 0 : i32
    return %c0_i32, %c0_i32_0 : i32, i32
  }
  func.func @transform_6(%arg0: i32) -> (i32, i32) {
    %c0_i32 = arith.constant 0 : i32
    %c0_i32_0 = arith.constant 0 : i32
    %c0_i32_1 = arith.constant 0 : i32
    return %c0_i32, %c0_i32_0 : i32, i32
  }
  func.func @transform_7(%arg0: i32) -> (i32, i32) {
    %c0_i32 = arith.constant 0 : i32
    %c0_i32_0 = arith.constant 0 : i32
    return %arg0, %c0_i32 : i32, i32
  }
}

</mosaic_0001>

<llo_original>
// kernel: tpu_custom_call.1
$region0: #{tpu_custom_call.1}
  #allocation0 [shape = 'u32[]', space=smem, size = 0x4, offset = 0x4, fixed_abs, tag = 'smem constant byte address 0x4 - core index']
  #allocation1 [shape = 'u32[144,128]{1,0:T(1,128)}', space=vmem, size = 0x12000, scoped, tag = 'internal scratch']
  %s0 = inlined_call_operand.hbm [shape: f32[8,784], index: 0, kind: input, shape index: {}]
  %s1 = inlined_call_operand.hbm [shape: f32[784,128], index: 1, kind: input, shape index: {}]
  %s2 = inlined_call_operand.vmem [shape: f32[1,128], index: 2, kind: input, shape index: {}]
  %s3 = inlined_call_operand.hbm [shape: f32[128,128], index: 3, kind: input, shape index: {}]
  %s4 = inlined_call_operand.vmem [shape: f32[1,128], index: 4, kind: input, shape index: {}]
  %s5 = inlined_call_operand.hbm [shape: f32[128,128], index: 5, kind: input, shape index: {}]
  %s6 = inlined_call_operand.vmem [shape: f32[1,128], index: 6, kind: input, shape index: {}]
  %s7 = inlined_call_operand.hbm [shape: f32[8,128], index: 7, kind: output, shape index: {}]
  %s8 = sld [smem:[#allocation0]]
  $region54: #{tpu_custom_call.1} parent=0
    _
  %s10 = ssub.s32 1, %s8
  %s11 = scalar_select 0, %s10, %s8
  $region1: #{tpu_custom_call.1} parent=0
    #allocation2 [shape = 'u8[28672]{0}', space=vmem, size = 0x7000, scoped, tag = 'input window, operand 0, single buffered']
    #allocation3 [shape = 's32[1]{0}', space=sflag, size = 0x4, scoped, tag = 'scoped memory for tpu_custom_call.1']
    #allocation4 [shape = 's32[1]{0}', space=sflag, size = 0x4, scoped, tag = 'scoped memory for tpu_custom_call.1']
    #allocation5 [shape = 'u8[401408]{0}', space=vmem, size = 0x62000, scoped, tag = 'input window, operand 1, single buffered']
    #allocation6 [shape = 's32[1]{0}', space=sflag, size = 0x4, scoped, tag = 'scoped memory for tpu_custom_call.1']
    #allocation7 [shape = 'u8[65536]{0}', space=vmem, size = 0x10000, scoped, tag = 'input window, operand 3, single buffered']
    #allocation8 [shape = 'u8[65536]{0}', space=vmem, size = 0x10000, scoped, tag = 'input window, operand 5, single buffered']
    #allocation9 [shape = 's32[1]{0}', space=sflag, size = 0x4, scoped, tag = 'scoped memory for tpu_custom_call.1']
    #allocation10 [shape = 'u8[4096]{0}', space=vmem, size = 0x1000, scoped, tag = 'output window, operand 0, single buffered']
    %12 = vsyncpa [#allocation3], 0
    %13 = vsyncpa [#allocation6], 0
    %14 = vsyncpa [#allocation9], 0
    %15 = vsyncpa [#allocation4], 0
    // Predicated region
    $region2: #{tpu_custom_call.1} parent=1 // pred_check
      _
    $region3: #{tpu_custom_call.1} parent=1 // pred_check_branch
      %17 = sbr.rel (0) target = $region5
    $region4: #{tpu_custom_call.1} parent=1 // pred_region
      %s19 = ssub.s32 896, 896
      %20 = vsyncadd [#allocation3], %s19
      %s22 = sshll.u32 [#allocation2], 4
      %s23 = int_to_ptr.vmem [resolvable:$true] %s22
      %25 = dma.hbm_to_vmem [thread:$0]  %s0, 896, %s23, [#allocation3]
    $region5: #{tpu_custom_call.1} parent=1 // pred_fallthru
      _
    // Predicated region
    $region6: #{tpu_custom_call.1} parent=1 // pred_check
      _
    $region7: #{tpu_custom_call.1} parent=1 // pred_check_branch
      %27 = sbr.rel (0) target = $region9
    $region8: #{tpu_custom_call.1} parent=1 // pred_region
      %s29 = ssub.s32 12544, 12544
      %30 = vsyncadd [#allocation6], %s29
      %s31 = sshll.u32 [#allocation5], 4
      %s32 = int_to_ptr.vmem [resolvable:$true] %s31
      %37 = dma.hbm_to_vmem [thread:$0]  %s1, 12544, %s32, [#allocation6], 128, 128, 8
    $region9: #{tpu_custom_call.1} parent=1 // pred_fallthru
      _
    // Predicated region
    $region10: #{tpu_custom_call.1} parent=1 // pred_check
      _
    $region11: #{tpu_custom_call.1} parent=1 // pred_check_branch
      %39 = sbr.rel (0) target = $region13
    $region12: #{tpu_custom_call.1} parent=1 // pred_region
      _
    $region13: #{tpu_custom_call.1} parent=1 // pred_fallthru
      _
    // Predicated region
    $region14: #{tpu_custom_call.1} parent=1 // pred_check
      _
    $region15: #{tpu_custom_call.1} parent=1 // pred_check_branch
      %41 = sbr.rel (0) target = $region17
    $region16: #{tpu_custom_call.1} parent=1 // pred_region
      %s43 = ssub.s32 2048, 2048
      %44 = vsyncadd [#allocation6], %s43
      %s45 = sshll.u32 [#allocation7], 4
      %s46 = int_to_ptr.vmem [resolvable:$true] %s45
      %51 = dma.hbm_to_vmem [thread:$0]  %s3, 2048, %s46, [#allocation6], 128, 128, 8
    $region17: #{tpu_custom_call.1} parent=1 // pred_fallthru
      _
    // Predicated region
    $region18: #{tpu_custom_call.1} parent=1 // pred_check
      _
    $region19: #{tpu_custom_call.1} parent=1 // pred_check_branch
      %53 = sbr.rel (0) target = $region21
    $region20: #{tpu_custom_call.1} parent=1 // pred_region
      _
    $region21: #{tpu_custom_call.1} parent=1 // pred_fallthru
      _
    // Predicated region
    $region22: #{tpu_custom_call.1} parent=1 // pred_check
      _
    $region23: #{tpu_custom_call.1} parent=1 // pred_check_branch
      %55 = sbr.rel (0) target = $region25
    $region24: #{tpu_custom_call.1} parent=1 // pred_region
      %s57 = ssub.s32 2048, 2048
      %58 = vsyncadd [#allocation9], %s57
      %s59 = sshll.u32 [#allocation8], 4
      %s60 = int_to_ptr.vmem [resolvable:$true] %s59
      %65 = dma.hbm_to_vmem [thread:$0]  %s5, 2048, %s60, [#allocation9], 128, 128, 8
    $region25: #{tpu_custom_call.1} parent=1 // pred_fallthru
      _
    // Predicated region
    $region26: #{tpu_custom_call.1} parent=1 // pred_check
      _
    $region27: #{tpu_custom_call.1} parent=1 // pred_check_branch
      %67 = sbr.rel (0) target = $region29
    $region28: #{tpu_custom_call.1} parent=1 // pred_region
      _
    $region29: #{tpu_custom_call.1} parent=1 // pred_fallthru
      _
    // Predicated region
    $region30: #{tpu_custom_call.1} parent=1 // pred_check
      _
    $region31: #{tpu_custom_call.1} parent=1 // pred_check_branch
      %69 = sbr.rel (0) target = $region33
    $region32: #{tpu_custom_call.1} parent=1 // pred_region
      %70 = dma.done [#allocation3], 896
    $region33: #{tpu_custom_call.1} parent=1 // pred_fallthru
      _
    // Predicated region
    $region34: #{tpu_custom_call.1} parent=1 // pred_check
      _
    $region35: #{tpu_custom_call.1} parent=1 // pred_check_branch
      %72 = sbr.rel (0) target = $region37
    $region36: #{tpu_custom_call.1} parent=1 // pred_region
      %73 = dma.done [#allocation6], 12544
    $region37: #{tpu_custom_call.1} parent=1 // pred_fallthru
      _
    // Predicated region
    $region38: #{tpu_custom_call.1} parent=1 // pred_check
      _
    $region39: #{tpu_custom_call.1} parent=1 // pred_check_branch
      %75 = sbr.rel (0) target = $region41
    $region40: #{tpu_custom_call.1} parent=1 // pred_region
      %76 = dma.done [#allocation6], 2048
    $region41: #{tpu_custom_call.1} parent=1 // pred_fallthru
      _
    // Predicated region
    $region42: #{tpu_custom_call.1} parent=1 // pred_check
      _
    $region43: #{tpu_custom_call.1} parent=1 // pred_check_branch
      %78 = sbr.rel (0) target = $region45
    $region44: #{tpu_custom_call.1} parent=1 // pred_region
      %79 = dma.done [#allocation9], 2048
    $region45: #{tpu_custom_call.1} parent=1 // pred_fallthru
      _
    %v80 = vld [vmem:[#allocation2] sm:$0xff]
    %v81 = vld [vmem:[#allocation2 + $0x8] sm:$0xff]
    %v82 = vld [vmem:[#allocation2 + $0x10] sm:$0xff]
    %v83 = vld [vmem:[#allocation2 + $0x18] sm:$0xff]
    %v84 = vld [vmem:[#allocation2 + $0x20] sm:$0xff]
    %v85 = vld [vmem:[#allocation2 + $0x28] sm:$0xff]
    %v86 = vld [vmem:[#allocation2 + $0x30] sm:$0xff]
    %v87 = vld [vmem:[#allocation5] sm:$0xff]
    %v88 = vld [vmem:[#allocation5 + $0x8] sm:$0xff]
    %v89 = vld [vmem:[#allocation5 + $0x10] sm:$0xff]
    %v90 = vld [vmem:[#allocation5 + $0x18] sm:$0xff]
    %v91 = vld [vmem:[#allocation5 + $0x20] sm:$0xff]
    %v92 = vld [vmem:[#allocation5 + $0x28] sm:$0xff]
    %v93 = vld [vmem:[#allocation5 + $0x30] sm:$0xff]
    %v94 = vld [vmem:[#allocation5 + $0x38] sm:$0xff]
    %v95 = vld [vmem:[#allocation5 + $0x40] sm:$0xff]
    %v96 = vld [vmem:[#allocation5 + $0x48] sm:$0xff]
    %v97 = vld [vmem:[#allocation5 + $0x50] sm:$0xff]
    %v98 = vld [vmem:[#allocation5 + $0x58] sm:$0xff]
    %v99 = vld [vmem:[#allocation5 + $0x60] sm:$0xff]
    %v100 = vld [vmem:[#allocation5 + $0x68] sm:$0xff]
    %v101 = vld [vmem:[#allocation5 + $0x70] sm:$0xff]
    %v102 = vld [vmem:[#allocation5 + $0x78] sm:$0xff]
    %v103 = vld [vmem:[#allocation5 + $0x80] sm:$0xff]
    %v104 = vld [vmem:[#allocation5 + $0x88] sm:$0xff]
    %v105 = vld [vmem:[#allocation5 + $0x90] sm:$0xff]
    %v106 = vld [vmem:[#allocation5 + $0x98] sm:$0xff]
    %v107 = vld [vmem:[#allocation5 + $0xa0] sm:$0xff]
    %v108 = vld [vmem:[#allocation5 + $0xa8] sm:$0xff]
    %v109 = vld [vmem:[#allocation5 + $0xb0] sm:$0xff]
    %v110 = vld [vmem:[#allocation5 + $0xb8] sm:$0xff]
    %v111 = vld [vmem:[#allocation5 + $0xc0] sm:$0xff]
    %v112 = vld [vmem:[#allocation5 + $0xc8] sm:$0xff]
    %v113 = vld [vmem:[#allocation5 + $0xd0] sm:$0xff]
    %v114 = vld [vmem:[#allocation5 + $0xd8] sm:$0xff]
    %v115 = vld [vmem:[#allocation5 + $0xe0] sm:$0xff]
    %v116 = vld [vmem:[#allocation5 + $0xe8] sm:$0xff]
    %v117 = vld [vmem:[#allocation5 + $0xf0] sm:$0xff]
    %v118 = vld [vmem:[#allocation5 + $0xf8] sm:$0xff]
    %v119 = vld [vmem:[#allocation5 + $0x100] sm:$0xff]
    %v120 = vld [vmem:[#allocation5 + $0x108] sm:$0xff]
    %v121 = vld [vmem:[#allocation5 + $0x110] sm:$0xff]
    %v122 = vld [vmem:[#allocation5 + $0x118] sm:$0xff]
    %v123 = vld [vmem:[#allocation5 + $0x120] sm:$0xff]
    %v124 = vld [vmem:[#allocation5 + $0x128] sm:$0xff]
    %v125 = vld [vmem:[#allocation5 + $0x130] sm:$0xff]
    %v126 = vld [vmem:[#allocation5 + $0x138] sm:$0xff]
    %v127 = vld [vmem:[#allocation5 + $0x140] sm:$0xff]
    %v128 = vld [vmem:[#allocation5 + $0x148] sm:$0xff]
    %v129 = vld [vmem:[#allocation5 + $0x150] sm:$0xff]
    %v130 = vld [vmem:[#allocation5 + $0x158] sm:$0xff]
    %v131 = vld [vmem:[#allocation5 + $0x160] sm:$0xff]
    %v132 = vld [vmem:[#allocation5 + $0x168] sm:$0xff]
    %v133 = vld [vmem:[#allocation5 + $0x170] sm:$0xff]
    %v134 = vld [vmem:[#allocation5 + $0x178] sm:$0xff]
    %v135 = vld [vmem:[#allocation5 + $0x180] sm:$0xff]
    %v136 = vld [vmem:[#allocation5 + $0x188] sm:$0xff]
    %v137 = vld [vmem:[#allocation5 + $0x190] sm:$0xff]
    %v138 = vld [vmem:[#allocation5 + $0x198] sm:$0xff]
    %v139 = vld [vmem:[#allocation5 + $0x1a0] sm:$0xff]
    %v140 = vld [vmem:[#allocation5 + $0x1a8] sm:$0xff]
    %v141 = vld [vmem:[#allocation5 + $0x1b0] sm:$0xff]
    %v142 = vld [vmem:[#allocation5 + $0x1b8] sm:$0xff]
    %v143 = vld [vmem:[#allocation5 + $0x1c0] sm:$0xff]
    %v144 = vld [vmem:[#allocation5 + $0x1c8] sm:$0xff]
    %v145 = vld [vmem:[#allocation5 + $0x1d0] sm:$0xff]
    %v146 = vld [vmem:[#allocation5 + $0x1d8] sm:$0xff]
    %v147 = vld [vmem:[#allocation5 + $0x1e0] sm:$0xff]
    %v148 = vld [vmem:[#allocation5 + $0x1e8] sm:$0xff]
    %v149 = vld [vmem:[#allocation5 + $0x1f0] sm:$0xff]
    %v150 = vld [vmem:[#allocation5 + $0x1f8] sm:$0xff]
    %v151 = vld [vmem:[#allocation5 + $0x200] sm:$0xff]
    %v152 = vld [vmem:[#allocation5 + $0x208] sm:$0xff]
    %v153 = vld [vmem:[#allocation5 + $0x210] sm:$0xff]
    %v154 = vld [vmem:[#allocation5 + $0x218] sm:$0xff]
    %v155 = vld [vmem:[#allocation5 + $0x220] sm:$0xff]
    %v156 = vld [vmem:[#allocation5 + $0x228] sm:$0xff]
    %v157 = vld [vmem:[#allocation5 + $0x230] sm:$0xff]
    %v158 = vld [vmem:[#allocation5 + $0x238] sm:$0xff]
    %v159 = vld [vmem:[#allocation5 + $0x240] sm:$0xff]
    %v160 = vld [vmem:[#allocation5 + $0x248] sm:$0xff]
    %v161 = vld [vmem:[#allocation5 + $0x250] sm:$0xff]
    %v162 = vld [vmem:[#allocation5 + $0x258] sm:$0xff]
    %v163 = vld [vmem:[#allocation5 + $0x260] sm:$0xff]
    %v164 = vld [vmem:[#allocation5 + $0x268] sm:$0xff]
    %v165 = vld [vmem:[#allocation5 + $0x270] sm:$0xff]
    %v166 = vld [vmem:[#allocation5 + $0x278] sm:$0xff]
    %v167 = vld [vmem:[#allocation5 + $0x280] sm:$0xff]
    %v168 = vld [vmem:[#allocation5 + $0x288] sm:$0xff]
    %v169 = vld [vmem:[#allocation5 + $0x290] sm:$0xff]
    %v170 = vld [vmem:[#allocation5 + $0x298] sm:$0xff]
    %v171 = vld [vmem:[#allocation5 + $0x2a0] sm:$0xff]
    %v172 = vld [vmem:[#allocation5 + $0x2a8] sm:$0xff]
    %v173 = vld [vmem:[#allocation5 + $0x2b0] sm:$0xff]
    %v174 = vld [vmem:[#allocation5 + $0x2b8] sm:$0xff]
    %v175 = vld [vmem:[#allocation5 + $0x2c0] sm:$0xff]
    %v176 = vld [vmem:[#allocation5 + $0x2c8] sm:$0xff]
    %v177 = vld [vmem:[#allocation5 + $0x2d0] sm:$0xff]
    %v178 = vld [vmem:[#allocation5 + $0x2d8] sm:$0xff]
    %v179 = vld [vmem:[#allocation5 + $0x2e0] sm:$0xff]
    %v180 = vld [vmem:[#allocation5 + $0x2e8] sm:$0xff]
    %v181 = vld [vmem:[#allocation5 + $0x2f0] sm:$0xff]
    %v182 = vld [vmem:[#allocation5 + $0x2f8] sm:$0xff]
    %v183 = vld [vmem:[#allocation5 + $0x300] sm:$0xff]
    %v184 = vld [vmem:[#allocation5 + $0x308] sm:$0xff]
    %v185 = vld [vmem:[%s2] sm:$0x1]
    %v187 = vlaneseq
    %v188 = vshrl.u32 %v187, 7
    %v189 = vsub.s32 0, %v188
    %v190 = vrot.slane %v185, %v189
    %vm192 = vcmask 130048
    %v194 = vsel %vm192, %v86, 0
    %196 = vmatprep.subr.mxu0 0.0
    %197 = vmatpush1.msra.mxu0 %v102
    %198 = vmatprep.subr.mxu0 0.0
    %199 = vmatpush1.msra.mxu0 %v101
    %200 = vmatprep.subr.mxu0 0.0
    %201 = vmatpush1.msra.mxu0 %v100
    %202 = vmatprep.subr.mxu0 0.0
    %203 = vmatpush1.msra.mxu0 %v99
    %204 = vmatprep.subr.mxu0 0.0
    %205 = vmatpush1.msra.mxu0 %v98
    %206 = vmatprep.subr.mxu0 0.0
    %207 = vmatpush1.msra.mxu0 %v97
    %208 = vmatprep.subr.mxu0 0.0
    %209 = vmatpush1.msra.mxu0 %v96
    %210 = vmatprep.subr.mxu0 0.0
    %211 = vmatpush1.msra.mxu0 %v95
    %212 = vmatprep.subr.mxu0 0.0
    %213 = vmatpush1.msra.mxu0 %v94
    %214 = vmatprep.subr.mxu0 0.0
    %215 = vmatpush1.msra.mxu0 %v93
    %216 = vmatprep.subr.mxu0 0.0
    %217 = vmatpush1.msra.mxu0 %v92
    %218 = vmatprep.subr.mxu0 0.0
    %219 = vmatpush1.msra.mxu0 %v91
    %220 = vmatprep.subr.mxu0 0.0
    %221 = vmatpush1.msra.mxu0 %v90
    %222 = vmatprep.subr.mxu0 0.0
    %223 = vmatpush1.msra.mxu0 %v89
    %224 = vmatprep.subr.mxu0 0.0
    %225 = vmatpush1.msra.mxu0 %v88
    %226 = vmatprep.subr.mxu0 0.0
    %227 = vmatpush1.msra.mxu0 %v87
    %228 = vmatprep.subr.mxu0 0.0
    %229 = vmatpush2.msra.mxu0 %v118
    %230 = vmatprep.subr.mxu0 0.0
    %231 = vmatpush2.msra.mxu0 %v117
    %232 = vmatprep.subr.mxu0 0.0
    %233 = vmatpush2.msra.mxu0 %v116
    %234 = vmatprep.subr.mxu0 0.0
    %235 = vmatpush2.msra.mxu0 %v115
    %236 = vmatprep.subr.mxu0 0.0
    %237 = vmatpush2.msra.mxu0 %v114
    %238 = vmatprep.subr.mxu0 0.0
    %239 = vmatpush2.msra.mxu0 %v113
    %240 = vmatprep.subr.mxu0 0.0
    %241 = vmatpush2.msra.mxu0 %v112
    %242 = vmatprep.subr.mxu0 0.0
    %243 = vmatpush2.msra.mxu0 %v111
    %244 = vmatprep.subr.mxu0 0.0
    %245 = vmatpush2.msra.mxu0 %v110
    %246 = vmatprep.subr.mxu0 0.0
    %247 = vmatpush2.msra.mxu0 %v109
    %248 = vmatprep.subr.mxu0 0.0
    %249 = vmatpush2.msra.mxu0 %v108
    %250 = vmatprep.subr.mxu0 0.0
    %251 = vmatpush2.msra.mxu0 %v107
    %252 = vmatprep.subr.mxu0 0.0
    %253 = vmatpush2.msra.mxu0 %v106
    %254 = vmatprep.subr.mxu0 0.0
    %255 = vmatpush2.msra.mxu0 %v105
    %256 = vmatprep.subr.mxu0 0.0
    %257 = vmatpush2.msra.mxu0 %v104
    %258 = vmatprep.subr.mxu0 0.0
    %259 = vmatpush2.msra.mxu0 %v103
    %260 = vmatprep.mubr.f32.mxu0 %v81
    %261 = vmatmul.mubr.f32.gmra.mxu0 %v80
    %v262 = vpop.f32.mrf.mxu0
    %v263 = vadd.f32 %v190, %v262
    %v264 = vpop.f32.mrf.mxu0
    %265 = vdwg.mxu0
    %266 = vmatprep.subr.mxu0 0.0
    %267 = vmatpush1.msra.mxu0 %v134
    %268 = vmatprep.subr.mxu0 0.0
    %269 = vmatpush1.msra.mxu0 %v133
    %270 = vmatprep.subr.mxu0 0.0
    %271 = vmatpush1.msra.mxu0 %v132
    %272 = vmatprep.subr.mxu0 0.0
    %273 = vmatpush1.msra.mxu0 %v131
    %274 = vmatprep.subr.mxu0 0.0
    %275 = vmatpush1.msra.mxu0 %v130
    %276 = vmatprep.subr.mxu0 0.0
    %277 = vmatpush1.msra.mxu0 %v129
    %278 = vmatprep.subr.mxu0 0.0
    %279 = vmatpush1.msra.mxu0 %v128
    %280 = vmatprep.subr.mxu0 0.0
    %281 = vmatpush1.msra.mxu0 %v127
    %282 = vmatprep.subr.mxu0 0.0
    %283 = vmatpush1.msra.mxu0 %v126
    %284 = vmatprep.subr.mxu0 0.0
    %285 = vmatpush1.msra.mxu0 %v125
    %286 = vmatprep.subr.mxu0 0.0
    %287 = vmatpush1.msra.mxu0 %v124
    %288 = vmatprep.subr.mxu0 0.0
    %289 = vmatpush1.msra.mxu0 %v123
    %290 = vmatprep.subr.mxu0 0.0
    %291 = vmatpush1.msra.mxu0 %v122
    %292 = vmatprep.subr.mxu0 0.0
    %293 = vmatpush1.msra.mxu0 %v121
    %294 = vmatprep.subr.mxu0 0.0
    %295 = vmatpush1.msra.mxu0 %v120
    %296 = vmatprep.subr.mxu0 0.0
    %297 = vmatpush1.msra.mxu0 %v119
    %298 = vmatprep.subr.mxu0 0.0
    %299 = vmatpush2.msra.mxu0 %v150
    %300 = vmatprep.subr.mxu0 0.0
    %301 = vmatpush2.msra.mxu0 %v149
    %302 = vmatprep.subr.mxu0 0.0
    %303 = vmatpush2.msra.mxu0 %v148
    %304 = vmatprep.subr.mxu0 0.0
    %305 = vmatpush2.msra.mxu0 %v147
    %306 = vmatprep.subr.mxu0 0.0
    %307 = vmatpush2.msra.mxu0 %v146
    %308 = vmatprep.subr.mxu0 0.0
    %309 = vmatpush2.msra.mxu0 %v145
    %310 = vmatprep.subr.mxu0 0.0
    %311 = vmatpush2.msra.mxu0 %v144
    %312 = vmatprep.subr.mxu0 0.0
    %313 = vmatpush2.msra.mxu0 %v143
    %314 = vmatprep.subr.mxu0 0.0
    %315 = vmatpush2.msra.mxu0 %v142
    %316 = vmatprep.subr.mxu0 0.0
    %317 = vmatpush2.msra.mxu0 %v141
    %318 = vmatprep.subr.mxu0 0.0
    %319 = vmatpush2.msra.mxu0 %v140
    %320 = vmatprep.subr.mxu0 0.0
    %321 = vmatpush2.msra.mxu0 %v139
    %322 = vmatprep.subr.mxu0 0.0
    %323 = vmatpush2.msra.mxu0 %v138
    %324 = vmatprep.subr.mxu0 0.0
    %325 = vmatpush2.msra.mxu0 %v137
    %326 = vmatprep.subr.mxu0 0.0
    %327 = vmatpush2.msra.mxu0 %v136
    %328 = vmatprep.subr.mxu0 0.0
    %329 = vmatpush2.msra.mxu0 %v135
    %330 = vmatprep.mubr.f32.mxu0 %v83
    %331 = vmatmul.mubr.f32.gmra.mxu0 %v82
    %v332 = vpop.f32.mrf.mxu0
    %v333 = vadd.f32 %v263, %v332
    %v334 = vpop.f32.mrf.mxu0
    %335 = vdwg.mxu0
    %336 = vmatprep.subr.mxu0 0.0
    %337 = vmatpush1.msra.mxu0 %v166
    %338 = vmatprep.subr.mxu0 0.0
    %339 = vmatpush1.msra.mxu0 %v165
    %340 = vmatprep.subr.mxu0 0.0
    %341 = vmatpush1.msra.mxu0 %v164
    %342 = vmatprep.subr.mxu0 0.0
    %343 = vmatpush1.msra.mxu0 %v163
    %344 = vmatprep.subr.mxu0 0.0
    %345 = vmatpush1.msra.mxu0 %v162
    %346 = vmatprep.subr.mxu0 0.0
    %347 = vmatpush1.msra.mxu0 %v161
    %348 = vmatprep.subr.mxu0 0.0
    %349 = vmatpush1.msra.mxu0 %v160
    %350 = vmatprep.subr.mxu0 0.0
    %351 = vmatpush1.msra.mxu0 %v159
    %352 = vmatprep.subr.mxu0 0.0
    %353 = vmatpush1.msra.mxu0 %v158
    %354 = vmatprep.subr.mxu0 0.0
    %355 = vmatpush1.msra.mxu0 %v157
    %356 = vmatprep.subr.mxu0 0.0
    %357 = vmatpush1.msra.mxu0 %v156
    %358 = vmatprep.subr.mxu0 0.0
    %359 = vmatpush1.msra.mxu0 %v155
    %360 = vmatprep.subr.mxu0 0.0
    %361 = vmatpush1.msra.mxu0 %v154
    %362 = vmatprep.subr.mxu0 0.0
    %363 = vmatpush1.msra.mxu0 %v153
    %364 = vmatprep.subr.mxu0 0.0
    %365 = vmatpush1.msra.mxu0 %v152
    %366 = vmatprep.subr.mxu0 0.0
    %367 = vmatpush1.msra.mxu0 %v151
    %368 = vmatprep.subr.mxu0 0.0
    %369 = vmatpush2.msra.mxu0 %v182
    %370 = vmatprep.subr.mxu0 0.0
    %371 = vmatpush2.msra.mxu0 %v181
    %372 = vmatprep.subr.mxu0 0.0
    %373 = vmatpush2.msra.mxu0 %v180
    %374 = vmatprep.subr.mxu0 0.0
    %375 = vmatpush2.msra.mxu0 %v179
    %376 = vmatprep.subr.mxu0 0.0
    %377 = vmatpush2.msra.mxu0 %v178
    %378 = vmatprep.subr.mxu0 0.0
    %379 = vmatpush2.msra.mxu0 %v177
    %380 = vmatprep.subr.mxu0 0.0
    %381 = vmatpush2.msra.mxu0 %v176
    %382 = vmatprep.subr.mxu0 0.0
    %383 = vmatpush2.msra.mxu0 %v175
    %384 = vmatprep.subr.mxu0 0.0
    %385 = vmatpush2.msra.mxu0 %v174
    %386 = vmatprep.subr.mxu0 0.0
    %387 = vmatpush2.msra.mxu0 %v173
    %388 = vmatprep.subr.mxu0 0.0
    %389 = vmatpush2.msra.mxu0 %v172
    %390 = vmatprep.subr.mxu0 0.0
    %391 = vmatpush2.msra.mxu0 %v171
    %392 = vmatprep.subr.mxu0 0.0
    %393 = vmatpush2.msra.mxu0 %v170
    %394 = vmatprep.subr.mxu0 0.0
    %395 = vmatpush2.msra.mxu0 %v169
    %396 = vmatprep.subr.mxu0 0.0
    %397 = vmatpush2.msra.mxu0 %v168
    %398 = vmatprep.subr.mxu0 0.0
    %399 = vmatpush2.msra.mxu0 %v167
    %400 = vmatprep.mubr.f32.mxu0 %v85
    %401 = vmatmul.mubr.f32.gmra.mxu0 %v84
    %v402 = vpop.f32.mrf.mxu0
    %v403 = vadd.f32 %v333, %v402
    %v404 = vpop.f32.mrf.mxu0
    %405 = vdwg.mxu0
    %406 = vmatprep.subr.mxu0 0.0
    %407 = vmatpush1.msra.mxu0 0.0
    %408 = vmatprep.subr.mxu0 0.0
    %409 = vmatpush1.msra.mxu0 0.0
    %410 = vmatprep.subr.mxu0 0.0
    %411 = vmatpush1.msra.mxu0 0.0
    %412 = vmatprep.subr.mxu0 0.0
    %413 = vmatpush1.msra.mxu0 0.0
    %414 = vmatprep.subr.mxu0 0.0
    %415 = vmatpush1.msra.mxu0 0.0
    %416 = vmatprep.subr.mxu0 0.0
    %417 = vmatpush1.msra.mxu0 0.0
    %418 = vmatprep.subr.mxu0 0.0
    %419 = vmatpush1.msra.mxu0 0.0
    %420 = vmatprep.subr.mxu0 0.0
    %421 = vmatpush1.msra.mxu0 0.0
    %422 = vmatprep.subr.mxu0 0.0
    %423 = vmatpush1.msra.mxu0 0.0
    %424 = vmatprep.subr.mxu0 0.0
    %425 = vmatpush1.msra.mxu0 0.0
    %426 = vmatprep.subr.mxu0 0.0
    %427 = vmatpush1.msra.mxu0 0.0
    %428 = vmatprep.subr.mxu0 0.0
    %429 = vmatpush1.msra.mxu0 0.0
    %430 = vmatprep.subr.mxu0 0.0
    %431 = vmatpush1.msra.mxu0 0.0
    %432 = vmatprep.subr.mxu0 0.0
    %433 = vmatpush1.msra.mxu0 0.0
    %434 = vmatprep.subr.mxu0 0.0
    %435 = vmatpush1.msra.mxu0 %v184
    %436 = vmatprep.subr.mxu0 0.0
    %437 = vmatpush1.msra.mxu0 %v183
    %438 = vmatprep.subr.mxu0 0.0
    %439 = vmatpush2.msra.mxu0 0.0
    %440 = vmatprep.subr.mxu0 0.0
    %441 = vmatpush2.msra.mxu0 0.0
    %442 = vmatprep.subr.mxu0 0.0
    %443 = vmatpush2.msra.mxu0 0.0
    %444 = vmatprep.subr.mxu0 0.0
    %445 = vmatpush2.msra.mxu0 0.0
    %446 = vmatprep.subr.mxu0 0.0
    %447 = vmatpush2.msra.mxu0 0.0
    %448 = vmatprep.subr.mxu0 0.0
    %449 = vmatpush2.msra.mxu0 0.0
    %450 = vmatprep.subr.mxu0 0.0
    %451 = vmatpush2.msra.mxu0 0.0
    %452 = vmatprep.subr.mxu0 0.0
    %453 = vmatpush2.msra.mxu0 0.0
    %454 = vmatprep.subr.mxu0 0.0
    %455 = vmatpush2.msra.mxu0 0.0
    %456 = vmatprep.subr.mxu0 0.0
    %457 = vmatpush2.msra.mxu0 0.0
    %458 = vmatprep.subr.mxu0 0.0
    %459 = vmatpush2.msra.mxu0 0.0
    %460 = vmatprep.subr.mxu0 0.0
    %461 = vmatpush2.msra.mxu0 0.0
    %462 = vmatprep.subr.mxu0 0.0
    %463 = vmatpush2.msra.mxu0 0.0
    %464 = vmatprep.subr.mxu0 0.0
    %465 = vmatpush2.msra.mxu0 0.0
    %466 = vmatprep.subr.mxu0 0.0
    %467 = vmatpush2.msra.mxu0 0.0
    %468 = vmatprep.subr.mxu0 0.0
    %469 = vmatpush2.msra.mxu0 0.0
    %470 = vmatprep.mubr.f32.mxu0 0.0
    %471 = vmatmul.mubr.f32.gmra.mxu0 %v194
    %v472 = vpop.f32.mrf.mxu0
    %v473 = vadd.f32 %v403, %v472
    %v474 = vpop.f32.mrf.mxu0
    %475 = vdwg.mxu0
    %v476 = vmax.f32 %v473, 0.0
    %v477 = vld [vmem:[#allocation7] sm:$0xff]
    %v478 = vld [vmem:[#allocation7 + $0x8] sm:$0xff]
    %v479 = vld [vmem:[#allocation7 + $0x10] sm:$0xff]
    %v480 = vld [vmem:[#allocation7 + $0x18] sm:$0xff]
    %v481 = vld [vmem:[#allocation7 + $0x20] sm:$0xff]
    %v482 = vld [vmem:[#allocation7 + $0x28] sm:$0xff]
    %v483 = vld [vmem:[#allocation7 + $0x30] sm:$0xff]
    %v484 = vld [vmem:[#allocation7 + $0x38] sm:$0xff]
    %v485 = vld [vmem:[#allocation7 + $0x40] sm:$0xff]
    %v486 = vld [vmem:[#allocation7 + $0x48] sm:$0xff]
    %v487 = vld [vmem:[#allocation7 + $0x50] sm:$0xff]
    %v488 = vld [vmem:[#allocation7 + $0x58] sm:$0xff]
    %v489 = vld [vmem:[#allocation7 + $0x60] sm:$0xff]
    %v490 = vld [vmem:[#allocation7 + $0x68] sm:$0xff]
    %v491 = vld [vmem:[#allocation7 + $0x70] sm:$0xff]
    %v492 = vld [vmem:[#allocation7 + $0x78] sm:$0xff]
    %v493 = vld [vmem:[%s4] sm:$0x1]
    %v495 = vlaneseq
    %v496 = vshrl.u32 %v495, 7
    %v497 = vsub.s32 0, %v496
    %v498 = vrot.slane %v493, %v497
    %500 = vmatprep.subr.mxu0 0.0
    %501 = vmatpush1.msra.mxu0 %v492
    %502 = vmatprep.subr.mxu0 0.0
    %503 = vmatpush1.msra.mxu0 %v491
    %504 = vmatprep.subr.mxu0 0.0
    %505 = vmatpush1.msra.mxu0 %v490
    %506 = vmatprep.subr.mxu0 0.0
    %507 = vmatpush1.msra.mxu0 %v489
    %508 = vmatprep.subr.mxu0 0.0
    %509 = vmatpush1.msra.mxu0 %v488
    %510 = vmatprep.subr.mxu0 0.0
    %511 = vmatpush1.msra.mxu0 %v487
    %512 = vmatprep.subr.mxu0 0.0
    %513 = vmatpush1.msra.mxu0 %v486
    %514 = vmatprep.subr.mxu0 0.0
    %515 = vmatpush1.msra.mxu0 %v485
    %516 = vmatprep.subr.mxu0 0.0
    %517 = vmatpush1.msra.mxu0 %v484
    %518 = vmatprep.subr.mxu0 0.0
    %519 = vmatpush1.msra.mxu0 %v483
    %520 = vmatprep.subr.mxu0 0.0
    %521 = vmatpush1.msra.mxu0 %v482
    %522 = vmatprep.subr.mxu0 0.0
    %523 = vmatpush1.msra.mxu0 %v481
    %524 = vmatprep.subr.mxu0 0.0
    %525 = vmatpush1.msra.mxu0 %v480
    %526 = vmatprep.subr.mxu0 0.0
    %527 = vmatpush1.msra.mxu0 %v479
    %528 = vmatprep.subr.mxu0 0.0
    %529 = vmatpush1.msra.mxu0 %v478
    %530 = vmatprep.subr.mxu0 0.0
    %531 = vmatpush1.msra.mxu0 %v477
    %532 = vmatprep.subr.mxu0 0.0
    %533 = vmatpush2.msra.mxu0 0.0
    %534 = vmatprep.subr.mxu0 0.0
    %535 = vmatpush2.msra.mxu0 0.0
    %536 = vmatprep.subr.mxu0 0.0
    %537 = vmatpush2.msra.mxu0 0.0
    %538 = vmatprep.subr.mxu0 0.0
    %539 = vmatpush2.msra.mxu0 0.0
    %540 = vmatprep.subr.mxu0 0.0
    %541 = vmatpush2.msra.mxu0 0.0
    %542 = vmatprep.subr.mxu0 0.0
    %543 = vmatpush2.msra.mxu0 0.0
    %544 = vmatprep.subr.mxu0 0.0
    %545 = vmatpush2.msra.mxu0 0.0
    %546 = vmatprep.subr.mxu0 0.0
    %547 = vmatpush2.msra.mxu0 0.0
    %548 = vmatprep.subr.mxu0 0.0
    %549 = vmatpush2.msra.mxu0 0.0
    %550 = vmatprep.subr.mxu0 0.0
    %551 = vmatpush2.msra.mxu0 0.0
    %552 = vmatprep.subr.mxu0 0.0
    %553 = vmatpush2.msra.mxu0 0.0
    %554 = vmatprep.subr.mxu0 0.0
    %555 = vmatpush2.msra.mxu0 0.0
    %556 = vmatprep.subr.mxu0 0.0
    %557 = vmatpush2.msra.mxu0 0.0
    %558 = vmatprep.subr.mxu0 0.0
    %559 = vmatpush2.msra.mxu0 0.0
    %560 = vmatprep.subr.mxu0 0.0
    %561 = vmatpush2.msra.mxu0 0.0
    %562 = vmatprep.subr.mxu0 0.0
    %563 = vmatpush2.msra.mxu0 0.0
    %564 = vmatprep.mubr.f32.mxu0 0.0
    %565 = vmatmul.mubr.f32.gmra.mxu0 %v476
    %v566 = vpop.f32.mrf.mxu0
    %v567 = vadd.f32 %v498, %v566
    %v568 = vpop.f32.mrf.mxu0
    %569 = vdwg.mxu0
    %v570 = vmax.f32 %v567, 0.0
    %v571 = vld [vmem:[#allocation8] sm:$0xff]
    %v572 = vld [vmem:[#allocation8 + $0x8] sm:$0xff]
    %v573 = vld [vmem:[#allocation8 + $0x10] sm:$0xff]
    %v574 = vld [vmem:[#allocation8 + $0x18] sm:$0xff]
    %v575 = vld [vmem:[#allocation8 + $0x20] sm:$0xff]
    %v576 = vld [vmem:[#allocation8 + $0x28] sm:$0xff]
    %v577 = vld [vmem:[#allocation8 + $0x30] sm:$0xff]
    %v578 = vld [vmem:[#allocation8 + $0x38] sm:$0xff]
    %v579 = vld [vmem:[#allocation8 + $0x40] sm:$0xff]
    %v580 = vld [vmem:[#allocation8 + $0x48] sm:$0xff]
    %v581 = vld [vmem:[#allocation8 + $0x50] sm:$0xff]
    %v582 = vld [vmem:[#allocation8 + $0x58] sm:$0xff]
    %v583 = vld [vmem:[#allocation8 + $0x60] sm:$0xff]
    %v584 = vld [vmem:[#allocation8 + $0x68] sm:$0xff]
    %v585 = vld [vmem:[#allocation8 + $0x70] sm:$0xff]
    %v586 = vld [vmem:[#allocation8 + $0x78] sm:$0xff]
    %v587 = vld [vmem:[%s6] sm:$0x1]
    %v589 = vlaneseq
    %v590 = vshrl.u32 %v589, 7
    %v591 = vsub.s32 0, %v590
    %v592 = vrot.slane %v587, %v591
    %594 = vmatprep.subr.mxu0 0.0
    %595 = vmatpush1.msra.mxu0 %v586
    %596 = vmatprep.subr.mxu0 0.0
    %597 = vmatpush1.msra.mxu0 %v585
    %598 = vmatprep.subr.mxu0 0.0
    %599 = vmatpush1.msra.mxu0 %v584
    %600 = vmatprep.subr.mxu0 0.0
    %601 = vmatpush1.msra.mxu0 %v583
    %602 = vmatprep.subr.mxu0 0.0
    %603 = vmatpush1.msra.mxu0 %v582
    %604 = vmatprep.subr.mxu0 0.0
    %605 = vmatpush1.msra.mxu0 %v581
    %606 = vmatprep.subr.mxu0 0.0
    %607 = vmatpush1.msra.mxu0 %v580
    %608 = vmatprep.subr.mxu0 0.0
    %609 = vmatpush1.msra.mxu0 %v579
    %610 = vmatprep.subr.mxu0 0.0
    %611 = vmatpush1.msra.mxu0 %v578
    %612 = vmatprep.subr.mxu0 0.0
    %613 = vmatpush1.msra.mxu0 %v577
    %614 = vmatprep.subr.mxu0 0.0
    %615 = vmatpush1.msra.mxu0 %v576
    %616 = vmatprep.subr.mxu0 0.0
    %617 = vmatpush1.msra.mxu0 %v575
    %618 = vmatprep.subr.mxu0 0.0
    %619 = vmatpush1.msra.mxu0 %v574
    %620 = vmatprep.subr.mxu0 0.0
    %621 = vmatpush1.msra.mxu0 %v573
    %622 = vmatprep.subr.mxu0 0.0
    %623 = vmatpush1.msra.mxu0 %v572
    %624 = vmatprep.subr.mxu0 0.0
    %625 = vmatpush1.msra.mxu0 %v571
    %626 = vmatprep.subr.mxu0 0.0
    %627 = vmatpush2.msra.mxu0 0.0
    %628 = vmatprep.subr.mxu0 0.0
    %629 = vmatpush2.msra.mxu0 0.0
    %630 = vmatprep.subr.mxu0 0.0
    %631 = vmatpush2.msra.mxu0 0.0
    %632 = vmatprep.subr.mxu0 0.0
    %633 = vmatpush2.msra.mxu0 0.0
    %634 = vmatprep.subr.mxu0 0.0
    %635 = vmatpush2.msra.mxu0 0.0
    %636 = vmatprep.subr.mxu0 0.0
    %637 = vmatpush2.msra.mxu0 0.0
    %638 = vmatprep.subr.mxu0 0.0
    %639 = vmatpush2.msra.mxu0 0.0
    %640 = vmatprep.subr.mxu0 0.0
    %641 = vmatpush2.msra.mxu0 0.0
    %642 = vmatprep.subr.mxu0 0.0
    %643 = vmatpush2.msra.mxu0 0.0
    %644 = vmatprep.subr.mxu0 0.0
    %645 = vmatpush2.msra.mxu0 0.0
    %646 = vmatprep.subr.mxu0 0.0
    %647 = vmatpush2.msra.mxu0 0.0
    %648 = vmatprep.subr.mxu0 0.0
    %649 = vmatpush2.msra.mxu0 0.0
    %650 = vmatprep.subr.mxu0 0.0
    %651 = vmatpush2.msra.mxu0 0.0
    %652 = vmatprep.subr.mxu0 0.0
    %653 = vmatpush2.msra.mxu0 0.0
    %654 = vmatprep.subr.mxu0 0.0
    %655 = vmatpush2.msra.mxu0 0.0
    %656 = vmatprep.subr.mxu0 0.0
    %657 = vmatpush2.msra.mxu0 0.0
    %658 = vmatprep.mubr.f32.mxu0 0.0
    %659 = vmatmul.mubr.f32.gmra.mxu0 %v570
    %v660 = vpop.f32.mrf.mxu0
    %v661 = vadd.f32 %v592, %v660
    %v662 = vpop.f32.mrf.mxu0
    %663 = vdwg.mxu0
    %664 = vst [vmem:[#allocation10] sm:$0xff] %v661
    // Predicated region
    $region46: #{tpu_custom_call.1} parent=1 // pred_check
      _
    $region47: #{tpu_custom_call.1} parent=1 // pred_check_branch
      %666 = sbr.rel (0) target = $region49
    $region48: #{tpu_custom_call.1} parent=1 // pred_region
      %s668 = ssub.s32 128, 128
      %669 = vsyncadd [#allocation4], %s668
      %s671 = sshll.u32 [#allocation10], 4
      %s672 = int_to_ptr.vmem [resolvable:$true] %s671
      %674 = dma.vmem_to_hbm [thread:$0]  %s672, 128, %s7, [#allocation4]
    $region49: #{tpu_custom_call.1} parent=1 // pred_fallthru
      _
    // Predicated region
    $region50: #{tpu_custom_call.1} parent=1 // pred_check
      _
    $region51: #{tpu_custom_call.1} parent=1 // pred_check_branch
      %676 = sbr.rel (0) target = $region53
    $region52: #{tpu_custom_call.1} parent=1 // pred_region
      %677 = dma.done [#allocation4], 128
    $region53: #{tpu_custom_call.1} parent=1 // pred_fallthru
      _
    %678 = vsyncpa [#allocation3], 1
    %679 = vsyncpa [#allocation6], 1
    %680 = vsyncpa [#allocation9], 1
    %681 = vsyncpa [#allocation4], 1

</llo_original>
